<compile_context>
chip_gen: v6e
topology: v6e:2x2x1
jax: 0.10.0
libtpu: 0.0.40
codegen_flags: <defaults>
</compile_context>

<pallas_src>
import functools

import jax
import jax.numpy as jnp
from jax.experimental import pallas as pl
from jax.experimental.pallas import tpu as pltpu


def _round_up(x, m):
    return ((x + m - 1) // m) * m


def _cdiv(a, b):
    return -(-a // b)


def _se_kernel(x_ref, w1t_ref, w2t_ref, o_ref, acc_ref, *,
               true_hw, thw, inv_hw, need_mask):
    # x_ref  : (TB, C, THW) — native layout: C on sublanes, HW tile on lanes.
    # w1t_ref: (C, Cr)  == W1.T  (pre-transposed in the wrapper)
    # w2t_ref: (Cr, C)  == W2.T
    # o_ref  : (1, TB, C)
    # acc_ref: (TB, C) f32 scratch; persists across the HW grid axis.
    hw = pl.program_id(1)

    @pl.when(hw == 0)
    def _init():
        acc_ref[...] = jnp.zeros_like(acc_ref)

    x = x_ref[...].astype(jnp.float32)
    if need_mask:
        # Ragged HW tail: boundary-block lanes past true H*W are undefined — zero them.
        lane = jax.lax.broadcasted_iota(jnp.int32, x.shape, dimension=2)
        x = jnp.where(hw * thw + lane < true_hw, x, 0.0)

    # Partial global-average-pool: lane-sum over this HW tile (XLU/VPU slack is huge
    # in a DMA-bound kernel).
    acc_ref[...] += jnp.sum(x, axis=2)

    @pl.when(hw == pl.num_programs(1) - 1)
    def _finalize():
        pooled = acc_ref[...] * inv_hw                        # (TB, C) mean over true H*W
        # Linear(C -> Cr, bias=False): pooled @ W1.T   (already transposed, no XLU)
        h = jnp.maximum(
            jnp.dot(pooled, w1t_ref[...].astype(jnp.float32),
                    preferred_element_type=jnp.float32), 0.0)  # ReLU
        # Linear(Cr -> C, bias=False): h @ W2.T
        y = jnp.dot(h, w2t_ref[...].astype(jnp.float32),
                    preferred_element_type=jnp.float32)
        o_ref[0] = jax.nn.sigmoid(y).astype(o_ref.dtype)       # Sigmoid


@functools.partial(jax.jit, static_argnames=("x_buf_budget",))
def se_layer(x, w1, w2, *, x_buf_budget=8 << 20):
    """x: (B, C, H, W).  w1: (C//r, C), w2: (C, C//r)  (PyTorch nn.Linear layout)."""
    B, C, H, W = x.shape
    HW = H * W
    Cr = w1.shape[0]
    itemsize = jnp.dtype(x.dtype).itemsize
    w_itemsize = jnp.dtype(w1.dtype).itemsize

    # Native layout — free reshape, no transpose, no pad.
    x3 = x.reshape(B, C, HW)

    # Pre-transpose the tiny weights (effectively free) so the kernel avoids XLU transposes.
    w1t = jnp.transpose(w1)       # (C, Cr)
    w2t = jnp.transpose(w2)       # (Cr, C)

    # Batch tiling: aim for >= 2 parallel batch tiles when B >= 2 (megacore on v7x).
    TB = max(1, min(8, _cdiv(B, 2)))
    n_b = _cdiv(B, TB)
    B_pad = n_b * TB

    # HW tiling (lanes): full HW if it fits the per-buffer budget, else split evenly
    # into multiples of 128 so waste is bounded by one lane group.
    row_bytes = TB * C * itemsize
    if HW * row_bytes <= x_buf_budget:
        THW = HW
    else:
        thw_cap = max(128, (x_buf_budget // row_bytes) // 128 * 128)
        n_hw0 = _cdiv(HW, thw_cap)
        THW = _round_up(_cdiv(HW, n_hw0), 128)
    n_hw = _cdiv(HW, THW)
    need_mask = (n_hw * THW != HW)

    grid = (n_b, n_hw)

    # Explicit VMEM budget: double-buffered x tile + resident weights + acc + out.
    x_block_bytes = TB * C * THW * itemsize
    w_bytes = 2 * C * Cr * w_itemsize
    small_bytes = 4 * TB * C * 4
    vmem_limit = int(min(max(2 * x_block_bytes + 2 * w_bytes + small_bytes + (4 << 20),
                             16 << 20),
                         48 << 20))   # <= 48 MiB: safe on v7x's 64 MiB physical VMEM

    cost = pl.CostEstimate(
        flops=B * C * HW + 4 * B * C * Cr,          # pooling adds + two tiny matmuls
        transcendentals=B * C,                       # sigmoid
        bytes_accessed=B * C * HW * itemsize + 2 * C * Cr * w_itemsize + B * C * itemsize,
    )

    kernel = functools.partial(_se_kernel, true_hw=HW, thw=THW,
                               inv_hw=float(1.0 / HW), need_mask=need_mask)

    y = pl.pallas_call(
        kernel,
        out_shape=jax.ShapeDtypeStruct((n_b, TB, C), x.dtype),
        grid_spec=pltpu.PrefetchScalarGridSpec(
            num_scalar_prefetch=0,
            grid=grid,
            in_specs=[
                pl.BlockSpec((TB, C, THW), lambda b, hw: (b, 0, hw)),
                pl.BlockSpec((C, Cr), lambda b, hw: (0, 0)),   # resident across grid
                pl.BlockSpec((Cr, C), lambda b, hw: (0, 0)),   # resident across grid
            ],
            out_specs=pl.BlockSpec((1, TB, C), lambda b, hw: (b, 0, 0)),
            scratch_shapes=[pltpu.VMEM((TB, C), jnp.float32)],
        ),
        compiler_params=pltpu.CompilerParams(
            dimension_semantics=("parallel", "arbitrary"),
            vmem_limit_bytes=vmem_limit,
        ),
        cost_estimate=cost,
    )(x3, w1t, w2t)

    return y.reshape(B_pad, C)[:B].reshape(B, C, 1, 1)


def se_layer_reference(x, w1, w2):
    """Pure-JAX reference matching the PyTorch module exactly (f32 math)."""
    B, C, H, W = x.shape
    pooled = jnp.mean(x.astype(jnp.float32), axis=(2, 3))               # (B, C)
    h = jnp.maximum(pooled @ w1.astype(jnp.float32).T, 0.0)             # (B, C//r)
    y = jax.nn.sigmoid(h @ w2.astype(jnp.float32).T)                    # (B, C)
    return y.reshape(B, C, 1, 1)


if __name__ == "__main__":
    # Test 1: small shapes consistent with the module (channel % reduction == 0).
    B, C, H, W = 2, 64, 8, 8
    Cr = C // 16
    kx, k1, k2 = jax.random.split(jax.random.PRNGKey(0), 3)
    x = jax.random.normal(kx, (B, C, H, W), dtype=jnp.float32)
    w1 = jax.random.normal(k1, (Cr, C), dtype=jnp.float32) * 0.1   # (out, in) = (C//r, C)
    w2 = jax.random.normal(k2, (C, Cr), dtype=jnp.float32) * 0.1   # (out, in) = (C, C//r)

    out = jax.block_until_ready(se_layer(x, w1, w2))
    ref = se_layer_reference(x, w1, w2)
    assert out.shape == (B, C, 1, 1), out.shape
    assert jnp.allclose(out, ref, atol=1e-5, rtol=1e-5), "mismatch vs reference (test 1)"

    # Test 2: odd batch + non-multiple-of-128 spatial size (single full-HW tile path,
    # ragged batch boundary block).
    B2, C2, H2, W2 = 3, 128, 7, 7
    Cr2 = C2 // 16
    kx2, k12, k22 = jax.random.split(jax.random.PRNGKey(0), 3)
    x2 = jax.random.normal(kx2, (B2, C2, H2, W2), dtype=jnp.float32)
    w12 = jax.random.normal(k12, (Cr2, C2), dtype=jnp.float32) * 0.1
    w22 = jax.random.normal(k22, (C2, Cr2), dtype=jnp.float32) * 0.1
    out2 = jax.block_until_ready(se_layer(x2, w12, w22))
    ref2 = se_layer_reference(x2, w12, w22)
    assert out2.shape == (B2, C2, 1, 1), out2.shape
    assert jnp.allclose(out2, ref2, atol=1e-5, rtol=1e-5), "mismatch vs reference (test 2)"

    # Test 3: force a tiny per-buffer budget to exercise the multi-HW-tile path with
    # an in-kernel masked ragged tail (HW=400 split into 128-lane tiles).
    B3, C3, H3, W3 = 2, 32, 20, 20
    Cr3 = C3 // 16
    kx3, k13, k23 = jax.random.split(jax.random.PRNGKey(0), 3)
    x3_ = jax.random.normal(kx3, (B3, C3, H3, W3), dtype=jnp.float32)
    w13 = jax.random.normal(k13, (Cr3, C3), dtype=jnp.float32) * 0.1
    w23 = jax.random.normal(k23, (C3, Cr3), dtype=jnp.float32) * 0.1
    out3 = jax.block_until_ready(se_layer(x3_, w13, w23, x_buf_budget=16 * 1024))
    ref3 = se_layer_reference(x3_, w13, w23)
    assert out3.shape == (B3, C3, 1, 1), out3.shape
    assert jnp.allclose(out3, ref3, atol=1e-5, rtol=1e-5), "mismatch vs reference (test 3)"

    # Test 4: bf16 activations + weights (dtype-aware tile sizing; f32 accumulation).
    B4, C4, H4, W4 = 4, 64, 14, 14
    Cr4 = C4 // 16
    kx4, k14, k24 = jax.random.split(jax.random.PRNGKey(0), 3)
    x4 = jax.random.normal(kx4, (B4, C4, H4, W4), dtype=jnp.bfloat16)
    w14 = (jax.random.normal(k14, (Cr4, C4), dtype=jnp.float32) * 0.1).astype(jnp.bfloat16)
    w24 = (jax.random.normal(k24, (C4, Cr4), dtype=jnp.float32) * 0.1).astype(jnp.bfloat16)
    out4 = jax.block_until_ready(se_layer(x4, w14, w24))
    ref4 = se_layer_reference(x4, w14, w24)
    assert out4.shape == (B4, C4, 1, 1), out4.shape
    assert jnp.allclose(out4.astype(jnp.float32), ref4, atol=1e-2, rtol=1e-2), \
        "mismatch vs reference (test 4)"

    print("KERNEL_OK")
</pallas_src>

<mosaic_0001>
module attributes {stable_mosaic.version = 11 : i64} {
  func.func @_se_kernel(%arg0: i32, %arg1: i32, %arg2: memref<1x64x64xf32, #tpu.memory_space<vmem>>, %arg3: memref<64x4xf32, #tpu.memory_space<vmem>>, %arg4: memref<4x64xf32, #tpu.memory_space<vmem>>, %arg5: memref<1x1x64xf32, #tpu.memory_space<vmem>>, %arg6: memref<1x64xf32, #tpu.memory_space<vmem>>) attributes {dimension_semantics = [#tpu.dimension_semantics<parallel>, #tpu.dimension_semantics<arbitrary>], iteration_bounds = array<i64: 2, 1>, scalar_prefetch = 0 : i64, scratch_operands = 1 : i64, tpu.core_type = #tpu.core_type<tc>, window_params = [{transform_indices = @transform_0, window_bounds = array<i64: 1, 64, 64>}, {pipeline_mode = #tpu.pipeline_mode<synchronous>, transform_indices = @transform_1, window_bounds = array<i64: 64, 4>}, {pipeline_mode = #tpu.pipeline_mode<synchronous>, transform_indices = @transform_2, window_bounds = array<i64: 4, 64>}, {transform_indices = @transform_3, window_bounds = array<i64: 1, 1, 64>}]} {
    %c0_i32 = arith.constant 0 : i32
    %0 = arith.cmpi eq, %arg1, %c0_i32 : i32
    %1 = arith.extui %0 : i1 to i32
    %c0_i32_0 = arith.constant 0 : i32
    %2 = arith.cmpi ne, %1, %c0_i32_0 : i32
    scf.if %2 {
      %cst_9 = arith.constant 0.000000e+00 : f32
      %11 = vector.broadcast %cst_9 : f32 to vector<1x64xf32>
      %c0_10 = arith.constant 0 : index
      %c0_11 = arith.constant 0 : index
      %12 = vector.load %arg6[%c0_10, %c0_11] : memref<1x64xf32, #tpu.memory_space<vmem>>, vector<1x64xf32>
      tpu.vector_store %arg6[%c0_10, %c0_11], %11 {strides = array<i32>} : memref<1x64xf32, #tpu.memory_space<vmem>>, vector<1x64xf32>,
    } else {
    }
    %c0 = arith.constant 0 : index
    %c0_1 = arith.constant 0 : index
    %c0_2 = arith.constant 0 : index
    %3 = vector.load %arg2[%c0, %c0_1, %c0_2] : memref<1x64x64xf32, #tpu.memory_space<vmem>>, vector<1x64x64xf32>
    %c0_3 = arith.constant 0 : index
    %c0_4 = arith.constant 0 : index
    %4 = vector.load %arg6[%c0_3, %c0_4] : memref<1x64xf32, #tpu.memory_space<vmem>>, vector<1x64xf32>
    %cst = arith.constant dense<0.000000e+00> : vector<1x64xf32>
    %5 = vector.multi_reduction <add>, %3, %cst [2] : vector<1x64x64xf32> to vector<1x64xf32>
    %6 = arith.addf %4, %5 : vector<1x64xf32>
    %c0_5 = arith.constant 0 : index
    %c0_6 = arith.constant 0 : index
    %7 = vector.load %arg6[%c0_5, %c0_6] : memref<1x64xf32, #tpu.memory_space<vmem>>, vector<1x64xf32>
    tpu.vector_store %arg6[%c0_5, %c0_6], %6 {strides = array<i32>} : memref<1x64xf32, #tpu.memory_space<vmem>>, vector<1x64xf32>,
    %c0_i32_7 = arith.constant 0 : i32
    %8 = arith.cmpi eq, %arg1, %c0_i32_7 : i32
    %9 = arith.extui %8 : i1 to i32
    %c0_i32_8 = arith.constant 0 : i32
    %10 = arith.cmpi ne, %9, %c0_i32_8 : i32
    scf.if %10 {
      %c0_9 = arith.constant 0 : index
      %c0_10 = arith.constant 0 : index
      %11 = vector.load %arg6[%c0_9, %c0_10] : memref<1x64xf32, #tpu.memory_space<vmem>>, vector<1x64xf32>
      %cst_11 = arith.constant 1.562500e-02 : f32
      %12 = vector.broadcast %cst_11 : f32 to vector<1x64xf32>
      %13 = arith.mulf %11, %12 : vector<1x64xf32>
      %c0_12 = arith.constant 0 : index
      %c0_13 = arith.constant 0 : index
      %14 = vector.load %arg3[%c0_12, %c0_13] : memref<64x4xf32, #tpu.memory_space<vmem>>, vector<64x4xf32>
      %cst_14 = arith.constant dense<0.000000e+00> : vector<1x4xf32>
      %15 = tpu.matmul %13, %14, %cst_14 {dimension_numbers = #tpu.dot_dimension_numbers<[1], [0], [0], [1], [0, 0, 1, 1], [], []>} : vector<1x64xf32>, vector<64x4xf32>, vector<1x4xf32> -> vector<1x4xf32>
      %cst_15 = arith.constant 0.000000e+00 : f32
      %16 = vector.broadcast %cst_15 : f32 to vector<1x4xf32>
      %17 = arith.maximumf %15, %16 : vector<1x4xf32>
      %c0_16 = arith.constant 0 : index
      %c0_17 = arith.constant 0 : index
      %18 = vector.load %arg4[%c0_16, %c0_17] : memref<4x64xf32, #tpu.memory_space<vmem>>, vector<4x64xf32>
      %cst_18 = arith.constant dense<0.000000e+00> : vector<1x64xf32>
      %19 = tpu.matmul %17, %18, %cst_18 {dimension_numbers = #tpu.dot_dimension_numbers<[1], [0], [0], [1], [0, 0, 1, 1], [], []>} : vector<1x4xf32>, vector<4x64xf32>, vector<1x64xf32> -> vector<1x64xf32>
      %20 = arith.negf %19 : vector<1x64xf32>
      %21 = math.exp %20 : vector<1x64xf32>
      %cst_19 = arith.constant 1.000000e+00 : f32
      %22 = vector.broadcast %cst_19 : f32 to vector<1x64xf32>
      %23 = arith.addf %22, %21 : vector<1x64xf32>
      %24 = arith.divf %22, %23 : vector<1x64xf32>
      %c0_20 = arith.constant 0 : index
      %c0_21 = arith.constant 0 : index
      %c0_22 = arith.constant 0 : index
      %25 = vector.load %arg5[%c0_20, %c0_21, %c0_22] : memref<1x1x64xf32, #tpu.memory_space<vmem>>, vector<1x1x64xf32>
      %26 = vector.shape_cast %25 : vector<1x1x64xf32> to vector<1x64xf32>
      %27 = vector.shape_cast %24 : vector<1x64xf32> to vector<1x1x64xf32>
      tpu.vector_store %arg5[%c0_20, %c0_21, %c0_22], %27 {strides = array<i32>} : memref<1x1x64xf32, #tpu.memory_space<vmem>>, vector<1x1x64xf32>,
    } else {
    }
    return
  }
  func.func @transform_0(%arg0: i32, %arg1: i32) -> (i32, i32, i32) {
    %c0_i32 = arith.constant 0 : i32
    %c0_i32_0 = arith.constant 0 : i32
    return %arg0, %c0_i32, %arg1 : i32, i32, i32
  }
  func.func @transform_1(%arg0: i32, %arg1: i32) -> (i32, i32) {
    %c0_i32 = arith.constant 0 : i32
    %c0_i32_0 = arith.constant 0 : i32
    %c0_i32_1 = arith.constant 0 : i32
    return %c0_i32, %c0_i32_0 : i32, i32
  }
  func.func @transform_2(%arg0: i32, %arg1: i32) -> (i32, i32) {
    %c0_i32 = arith.constant 0 : i32
    %c0_i32_0 = arith.constant 0 : i32
    %c0_i32_1 = arith.constant 0 : i32
    return %c0_i32, %c0_i32_0 : i32, i32
  }
  func.func @transform_3(%arg0: i32, %arg1: i32) -> (i32, i32, i32) {
    %c0_i32 = arith.constant 0 : i32
    %c0_i32_0 = arith.constant 0 : i32
    %c0_i32_1 = arith.constant 0 : i32
    return %arg0, %c0_i32, %c0_i32_0 : i32, i32, i32
  }
}

</mosaic_0001>

<llo_original>
// kernel: se_layer.1
$region0: #{se_layer.1}
  #allocation0 [shape = 'u32[]', space=smem, size = 0x4, offset = 0x4, fixed_abs, tag = 'smem constant byte address 0x4 - core index']
  #allocation1 [shape = 'u32[144,128]{1,0:T(1,128)}', space=vmem, size = 0x12000, scoped, tag = 'internal scratch']
  #allocation2 [shape = 'f32[1,64]{1,0:T(1,128)}', space=vmem, size = 0x200, scoped, tag = 'scratch operand']
  %s0 = inlined_call_operand.vmem [shape: f32[2,64,64], index: 0, kind: input, shape index: {}]
  %s1 = inlined_call_operand.vmem [shape: f32[64,4], index: 1, kind: input, shape index: {}]
  %s2 = inlined_call_operand.vmem [shape: f32[4,64], index: 2, kind: input, shape index: {}]
  %s3 = inlined_call_operand.hbm [shape: f32[2,1,64], index: 3, kind: output, shape index: {}]
  %s4 = sld [smem:[#allocation0]]
  $region53: #{se_layer.1} parent=0
    _
  %s6 = ssub.s32 1, %s4
  %s7 = scalar_select 0, %s6, %s4
  $region1: #{se_layer.1} parent=0
    #allocation3 [shape = 'u8[1024]{0}', space=vmem, size = 0x400, scoped, tag = 'output window, operand 0']
    #allocation4 [shape = 's32[2]{0}', space=sflag, size = 0x8, scoped, tag = 'scoped memory for se_layer.1']
    %8 = vsyncpa [#allocation4], 0
    %s9 = scalar_lea.sflag [#allocation4], 1
    %10 = vsyncpa %s9, 0
    loop: start=0, step=1, limit=4
    $region2: #{se_layer.1} parent=1 // loop_pre_header
      _
    $region3: #{se_layer.1} parent=1 // loop_header
      %s12 = sphi 0, %s16
      %p13 = scmp.ge.s32.totalorder %s12, 4
      %s19 = sphi 0, %s31
      %s20 = sphi 0, %s27
      %s21 = sphi 0, %s19
      %s22 = sphi 0, %s20
      %s23 = sphi 0, %s21
      %s24 = sphi 0, %s22
      %s36 = sphi 0, %s38
      %s39 = sphi 0, %s36
      %s40 = sphi 0, %s39
      %s56 = sphi 0, %s40
      %s60 = sphi 0, %s60
      %s62 = sphi 0, %s60
      %s63 = sphi 0, %s62
      %s77 = sphi 0, %s63
      %s81 = sphi 0, %s81
      %s83 = sphi 0, %s81
      %s84 = sphi 0, %s83
      %s98 = sphi 0, %s84
      %s104 = sphi 0, %s106
      %s107 = sphi 0, %s104
      %s108 = sphi 0, %s107
      %s124 = sphi 0, %s108
    $region4: #{se_layer.1} parent=1 // loop_header_branch
      %15 = sbr.rel (%p13) target = $region8
    $region5: #{se_layer.1} parent=1 // loop_body
      %s17 = ssub.s32 %s12, 1
      %s18 = ssub.s32 %s12, 2
      %s25 = sadd.s32 1, %s20
      %p26 = scmp.ge.s32.totalorder %s25, 1
      %s27 = scalar_select %p26, 0, %s25
      %s28 = sadd.s32 1, %s19
      %s29 = scalar_select %p26, %s28, %s19
      %p30 = scmp.ge.s32.totalorder %s29, 2
      %s31 = scalar_select %p30, 0, %s29
      %s32 = ssub.s32 %s19, %s31
      %s33 = ssub.s32 %s20, %s27
      %s34 = sor.u32 %s32, %s33
      %p35 = scmp.eq.s32.totalorder %s34, 0
      %s37 = sadd.s32 %s36, 1
      %s38 = scalar_select %p35, %s36, %s37
      %p41 = pneg %p35
      %p42 = scmp.eq.s32.totalorder %s12, 1
      %p43 = por %p41, %p42
      %p44 = scmp.ne.s32.totalorder %s36, %s39
      %p45 = scmp.eq.s32.totalorder %s12, 0
      %p46 = por %p44, %p45
      %p47 = scmp.ne.s32.totalorder %s36, %s39
      %p48 = scmp.eq.s32.totalorder %s17, 1
      %p49 = por %p47, %p48
      %p50 = scmp.ne.s32.totalorder %s39, %s40
      %p51 = scmp.eq.s32.totalorder %s17, 0
      %p52 = por %p50, %p51
      %p53 = scmp.ne.s32.totalorder %s39, %s40
      %p54 = scmp.eq.s32.totalorder %s18, 1
      %p55 = por %p53, %p54
      %p57 = scmp.ne.s32.totalorder %s40, %s56
      %p58 = scmp.eq.s32.totalorder %s18, 0
      %p59 = por %p57, %p58
      %s61 = sadd.s32 %s60, 1
      %p64 = scmp.eq.s32.totalorder %s12, 1
      %p65 = scmp.ne.s32.totalorder %s60, %s62
      %p66 = scmp.eq.s32.totalorder %s12, 0
      %p67 = por %p65, %p66
      %p68 = scmp.ne.s32.totalorder %s60, %s62
      %p69 = scmp.eq.s32.totalorder %s17, 1
      %p70 = por %p68, %p69
      %p71 = scmp.ne.s32.totalorder %s62, %s63
      %p72 = scmp.eq.s32.totalorder %s17, 0
      %p73 = por %p71, %p72
      %p74 = scmp.ne.s32.totalorder %s62, %s63
      %p75 = scmp.eq.s32.totalorder %s18, 1
      %p76 = por %p74, %p75
      %p78 = scmp.ne.s32.totalorder %s63, %s77
      %p79 = scmp.eq.s32.totalorder %s18, 0
      %p80 = por %p78, %p79
      %s82 = sadd.s32 %s81, 1
      %p85 = scmp.eq.s32.totalorder %s12, 1
      %p86 = scmp.ne.s32.totalorder %s81, %s83
      %p87 = scmp.eq.s32.totalorder %s12, 0
      %p88 = por %p86, %p87
      %p89 = scmp.ne.s32.totalorder %s81, %s83
      %p90 = scmp.eq.s32.totalorder %s17, 1
      %p91 = por %p89, %p90
      %p92 = scmp.ne.s32.totalorder %s83, %s84
      %p93 = scmp.eq.s32.totalorder %s17, 0
      %p94 = por %p92, %p93
      %p95 = scmp.ne.s32.totalorder %s83, %s84
      %p96 = scmp.eq.s32.totalorder %s18, 1
      %p97 = por %p95, %p96
      %p99 = scmp.ne.s32.totalorder %s84, %s98
      %p100 = scmp.eq.s32.totalorder %s18, 0
      %p101 = por %p99, %p100
      %s102 = ssub.s32 %s19, %s31
      %p103 = scmp.eq.s32.totalorder %s102, 0
      %s105 = sadd.s32 %s104, 1
      %s106 = scalar_select %p103, %s104, %s105
      %p109 = pneg %p103
      %p110 = scmp.eq.s32.totalorder %s12, 1
      %p111 = por %p109, %p110
      %p112 = scmp.ne.s32.totalorder %s104, %s107
      %p113 = scmp.eq.s32.totalorder %s12, 0
      %p114 = por %p112, %p113
      %p115 = scmp.ne.s32.totalorder %s104, %s107
      %p116 = scmp.eq.s32.totalorder %s17, 1
      %p117 = por %p115, %p116
      %p118 = scmp.ne.s32.totalorder %s107, %s108
      %p119 = scmp.eq.s32.totalorder %s17, 0
      %p120 = por %p118, %p119
      %p121 = scmp.ne.s32.totalorder %s107, %s108
      %p122 = scmp.eq.s32.totalorder %s18, 1
      %p123 = por %p121, %p122
      %p125 = scmp.ne.s32.totalorder %s108, %s124
      %p126 = scmp.eq.s32.totalorder %s18, 0
      %p127 = por %p125, %p126
      %p128 = scmp.le.s32.totalorder 1, %s12
      %p129 = scmp.lt.s32.totalorder %s12, 3
      %p130 = pnand %p128, %p129
      %p131 = pneg %p130
      // Predicated region
      $region9: #{se_layer.1} parent=5 // pred_check
        _
      $region10: #{se_layer.1} parent=5 // pred_check_branch
        %133 = sbr.rel (%p130) target = $region12
      $region11: #{se_layer.1} parent=5 // pred_region
        %s134 = ssub.s32 %s12, 1
        // Predicated region
        $region13: #{se_layer.1} parent=11 // pred_check
          %p135 = pneg %p73
        $region14: #{se_layer.1} parent=11 // pred_check_branch
          %137 = sbr.rel (%p135) target = $region16
        $region15: #{se_layer.1} parent=11 // pred_region
          _
        $region16: #{se_layer.1} parent=11 // pred_fallthru
          _
        // Predicated region
        $region17: #{se_layer.1} parent=11 // pred_check
          %p138 = pneg %p94
        $region18: #{se_layer.1} parent=11 // pred_check_branch
          %140 = sbr.rel (%p138) target = $region20
        $region19: #{se_layer.1} parent=11 // pred_region
          _
        $region20: #{se_layer.1} parent=11 // pred_fallthru
          _
      $region12: #{se_layer.1} parent=5 // pred_fallthru
        _
      %p141 = scmp.lt.s32.totalorder %s12, 2
      // Predicated region
      $region21: #{se_layer.1} parent=5 // pred_check
        %p142 = pneg %p141
      $region22: #{se_layer.1} parent=5 // pred_check_branch
        %144 = sbr.rel (%p142) target = $region24
      $region23: #{se_layer.1} parent=5 // pred_region
        // Predicated region
        $region25: #{se_layer.1} parent=23 // pred_check
          %p145 = pneg %p46
        $region26: #{se_layer.1} parent=23 // pred_check_branch
          %147 = sbr.rel (%p145) target = $region28
        $region27: #{se_layer.1} parent=23 // pred_region
          %p148 = scmp.lt.s32.totalorder %s19, 1
          %s149 = scalar_select %p148, %s19, 1
          %p150 = scmp.lt.s32.totalorder %s20, 0
          %s151 = scalar_select %p150, %s20, 0
          %s152 = smul.addr %s149, 8
          %s153 = sadd.s32 %s151, %s152
          %s154 = smul.addr %s153, 8
          %s155 = scalar_lea.vmem %s0, %s154
        $region28: #{se_layer.1} parent=23 // pred_fallthru
          _
      $region24: #{se_layer.1} parent=5 // pred_fallthru
        _
      %p156 = scmp.le.s32.totalorder 1, %s12
      %p157 = scmp.lt.s32.totalorder %s12, 3
      %p158 = pnand %p156, %p157
      %p159 = pneg %p158
      // Predicated region
      $region29: #{se_layer.1} parent=5 // pred_check
        _
      $region30: #{se_layer.1} parent=5 // pred_check_branch
        %161 = sbr.rel (%p158) target = $region32
      $region31: #{se_layer.1} parent=5 // pred_region
        %s162 = ssub.s32 %s12, 1
        %p163 = scmp.lt.s32.totalorder %s21, 1
        %s164 = scalar_select %p163, %s21, 1
        %p165 = scmp.lt.s32.totalorder %s22, 0
        %s166 = scalar_select %p165, %s22, 0
        %s167 = smul.addr %s164, 8
        %s168 = sadd.s32 %s166, %s167
        %s169 = smul.addr %s168, 8
        %s170 = scalar_lea.vmem %s0, %s169
        %p171 = pneg %p52
        %p172 = pneg %p49
        %p173 = pneg %p73
        %p174 = pneg %p70
        %p175 = pneg %p94
        %p176 = pneg %p91
        %p177 = pneg %p120
        %p178 = pneg %p117
        %s179 = sand.u32 %s107, 1
        %s180 = scalar_lea.sflag [#allocation4], %s179
        %s181 = sand.u32 %s107, 1
        %s182 = scalar_lea.vmem [#allocation3], %s181
        %p183 = scmp.lt.s32.totalorder %s21, 1
        %s184 = scalar_select %p183, %s21, 1
        %p185 = scmp.lt.s32.totalorder %s22, 0
        %s186 = scalar_select %p185, %s22, 0
        %s187 = smul.addr %s184, 8
        %s188 = sadd.s32 %s186, %s187
        %s189 = smul.addr %s188, 8
        %s190 = scalar_lea.vmem %s0, %s189
        %p191 = scmp.eq.s32.totalorder %s22, 0
        // Predicated region
        $region33: #{se_layer.1} parent=31 // pred_check
          %p192 = pneg %p191
        $region34: #{se_layer.1} parent=31 // pred_check_branch
          %194 = sbr.rel (%p192) target = $region36
        $region35: #{se_layer.1} parent=31 // pred_region
          %vm195 = vcmask 516096
          %196 = vst.msk [vmem:[#allocation2] sm:$0x1] %vm195, 0.0
        $region36: #{se_layer.1} parent=31 // pred_fallthru
          _
        %v197 = vld [vmem:[%s190] sm:$0xff]
        %v198 = vld [vmem:[%s190 + $0x8] sm:$0xff]
        %v199 = vld [vmem:[%s190 + $0x10] sm:$0xff]
        %v200 = vld [vmem:[%s190 + $0x18] sm:$0xff]
        %v201 = vld [vmem:[%s190 + $0x20] sm:$0xff]
        %v202 = vld [vmem:[%s190 + $0x28] sm:$0xff]
        %v203 = vld [vmem:[%s190 + $0x30] sm:$0xff]
        %v204 = vld [vmem:[%s190 + $0x38] sm:$0xff]
        %v205 = vld [vmem:[#allocation2] sm:$0x1]
        %vm206 = vcmask 523264
        %v207 = vsel %vm206, %v197, 0.0
        %208 = vadd.xlane.f32.xlu0 %v207
        %v209 = vpop.xlane.xlu0 %208
        %v210 = vsel %vm206, %v198, 0.0
        %211 = vadd.xlane.f32.xlu0 %v210
        %v212 = vpop.xlane.xlu0 %211
        %v213 = vsel %vm206, %v199, 0.0
        %214 = vadd.xlane.f32.xlu0 %v213
        %v215 = vpop.xlane.xlu0 %214
        %v216 = vsel %vm206, %v200, 0.0
        %217 = vadd.xlane.f32.xlu0 %v216
        %v218 = vpop.xlane.xlu0 %217
        %v219 = vsel %vm206, %v201, 0.0
        %220 = vadd.xlane.f32.xlu0 %v219
        %v221 = vpop.xlane.xlu0 %220
        %v222 = vsel %vm206, %v202, 0.0
        %223 = vadd.xlane.f32.xlu0 %v222
        %v224 = vpop.xlane.xlu0 %223
        %v225 = vsel %vm206, %v203, 0.0
        %226 = vadd.xlane.f32.xlu0 %v225
        %v227 = vpop.xlane.xlu0 %226
        %v228 = vsel %vm206, %v204, 0.0
        %229 = vadd.xlane.f32.xlu0 %v228
        %v230 = vpop.xlane.xlu0 %229
        %v239 = vlaneseq
        %v240 = vshrl.u32 %v239, 7
        %v241 = vsub.s32 0, %v240
        %v242 = vrot.slane %v209, %v241
        %v243 = vlaneseq
        %v244 = vshrl.u32 %v243, 7
        %v245 = vsub.s32 1, %v244
        %v246 = vrot.slane %v209, %v245
        %v247 = vlaneseq
        %v248 = vshrl.u32 %v247, 7
        %v249 = vsub.s32 2, %v248
        %v250 = vrot.slane %v209, %v249
        %v251 = vlaneseq
        %v252 = vshrl.u32 %v251, 7
        %v253 = vsub.s32 3, %v252
        %v254 = vrot.slane %v209, %v253
        %v255 = vlaneseq
        %v256 = vshrl.u32 %v255, 7
        %v257 = vsub.s32 4, %v256
        %v258 = vrot.slane %v209, %v257
        %v259 = vlaneseq
        %v260 = vshrl.u32 %v259, 7
        %v261 = vsub.s32 5, %v260
        %v262 = vrot.slane %v209, %v261
        %v263 = vlaneseq
        %v264 = vshrl.u32 %v263, 7
        %v265 = vsub.s32 6, %v264
        %v266 = vrot.slane %v209, %v265
        %v267 = vlaneseq
        %v268 = vshrl.u32 %v267, 7
        %v269 = vsub.s32 7, %v268
        %v270 = vrot.slane %v209, %v269
        %v271 = vlaneseq
        %v272 = vshrl.u32 %v271, 7
        %v273 = vsub.s32 0, %v272
        %v274 = vrot.slane %v212, %v273
        %v275 = vlaneseq
        %v276 = vshrl.u32 %v275, 7
        %v277 = vsub.s32 1, %v276
        %v278 = vrot.slane %v212, %v277
        %v279 = vlaneseq
        %v280 = vshrl.u32 %v279, 7
        %v281 = vsub.s32 2, %v280
        %v282 = vrot.slane %v212, %v281
        %v283 = vlaneseq
        %v284 = vshrl.u32 %v283, 7
        %v285 = vsub.s32 3, %v284
        %v286 = vrot.slane %v212, %v285
        %v287 = vlaneseq
        %v288 = vshrl.u32 %v287, 7
        %v289 = vsub.s32 4, %v288
        %v290 = vrot.slane %v212, %v289
        %v291 = vlaneseq
        %v292 = vshrl.u32 %v291, 7
        %v293 = vsub.s32 5, %v292
        %v294 = vrot.slane %v212, %v293
        %v295 = vlaneseq
        %v296 = vshrl.u32 %v295, 7
        %v297 = vsub.s32 6, %v296
        %v298 = vrot.slane %v212, %v297
        %v299 = vlaneseq
        %v300 = vshrl.u32 %v299, 7
        %v301 = vsub.s32 7, %v300
        %v302 = vrot.slane %v212, %v301
        %v303 = vlaneseq
        %v304 = vshrl.u32 %v303, 7
        %v305 = vsub.s32 0, %v304
        %v306 = vrot.slane %v215, %v305
        %v307 = vlaneseq
        %v308 = vshrl.u32 %v307, 7
        %v309 = vsub.s32 1, %v308
        %v310 = vrot.slane %v215, %v309
        %v311 = vlaneseq
        %v312 = vshrl.u32 %v311, 7
        %v313 = vsub.s32 2, %v312
        %v314 = vrot.slane %v215, %v313
        %v315 = vlaneseq
        %v316 = vshrl.u32 %v315, 7
        %v317 = vsub.s32 3, %v316
        %v318 = vrot.slane %v215, %v317
        %v319 = vlaneseq
        %v320 = vshrl.u32 %v319, 7
        %v321 = vsub.s32 4, %v320
        %v322 = vrot.slane %v215, %v321
        %v323 = vlaneseq
        %v324 = vshrl.u32 %v323, 7
        %v325 = vsub.s32 5, %v324
        %v326 = vrot.slane %v215, %v325
        %v327 = vlaneseq
        %v328 = vshrl.u32 %v327, 7
        %v329 = vsub.s32 6, %v328
        %v330 = vrot.slane %v215, %v329
        %v331 = vlaneseq
        %v332 = vshrl.u32 %v331, 7
        %v333 = vsub.s32 7, %v332
        %v334 = vrot.slane %v215, %v333
        %v335 = vlaneseq
        %v336 = vshrl.u32 %v335, 7
        %v337 = vsub.s32 0, %v336
        %v338 = vrot.slane %v218, %v337
        %v339 = vlaneseq
        %v340 = vshrl.u32 %v339, 7
        %v341 = vsub.s32 1, %v340
        %v342 = vrot.slane %v218, %v341
        %v343 = vlaneseq
        %v344 = vshrl.u32 %v343, 7
        %v345 = vsub.s32 2, %v344
        %v346 = vrot.slane %v218, %v345
        %v347 = vlaneseq
        %v348 = vshrl.u32 %v347, 7
        %v349 = vsub.s32 3, %v348
        %v350 = vrot.slane %v218, %v349
        %v351 = vlaneseq
        %v352 = vshrl.u32 %v351, 7
        %v353 = vsub.s32 4, %v352
        %v354 = vrot.slane %v218, %v353
        %v355 = vlaneseq
        %v356 = vshrl.u32 %v355, 7
        %v357 = vsub.s32 5, %v356
        %v358 = vrot.slane %v218, %v357
        %v359 = vlaneseq
        %v360 = vshrl.u32 %v359, 7
        %v361 = vsub.s32 6, %v360
        %v362 = vrot.slane %v218, %v361
        %v363 = vlaneseq
        %v364 = vshrl.u32 %v363, 7
        %v365 = vsub.s32 7, %v364
        %v366 = vrot.slane %v218, %v365
        %v367 = vlaneseq
        %v368 = vshrl.u32 %v367, 7
        %v369 = vsub.s32 0, %v368
        %v370 = vrot.slane %v221, %v369
        %v371 = vlaneseq
        %v372 = vshrl.u32 %v371, 7
        %v373 = vsub.s32 1, %v372
        %v374 = vrot.slane %v221, %v373
        %v375 = vlaneseq
        %v376 = vshrl.u32 %v375, 7
        %v377 = vsub.s32 2, %v376
        %v378 = vrot.slane %v221, %v377
        %v379 = vlaneseq
        %v380 = vshrl.u32 %v379, 7
        %v381 = vsub.s32 3, %v380
        %v382 = vrot.slane %v221, %v381
        %v383 = vlaneseq
        %v384 = vshrl.u32 %v383, 7
        %v385 = vsub.s32 4, %v384
        %v386 = vrot.slane %v221, %v385
        %v387 = vlaneseq
        %v388 = vshrl.u32 %v387, 7
        %v389 = vsub.s32 5, %v388
        %v390 = vrot.slane %v221, %v389
        %v391 = vlaneseq
        %v392 = vshrl.u32 %v391, 7
        %v393 = vsub.s32 6, %v392
        %v394 = vrot.slane %v221, %v393
        %v395 = vlaneseq
        %v396 = vshrl.u32 %v395, 7
        %v397 = vsub.s32 7, %v396
        %v398 = vrot.slane %v221, %v397
        %v399 = vlaneseq
        %v400 = vshrl.u32 %v399, 7
        %v401 = vsub.s32 0, %v400
        %v402 = vrot.slane %v224, %v401
        %v403 = vlaneseq
        %v404 = vshrl.u32 %v403, 7
        %v405 = vsub.s32 1, %v404
        %v406 = vrot.slane %v224, %v405
        %v407 = vlaneseq
        %v408 = vshrl.u32 %v407, 7
        %v409 = vsub.s32 2, %v408
        %v410 = vrot.slane %v224, %v409
        %v411 = vlaneseq
        %v412 = vshrl.u32 %v411, 7
        %v413 = vsub.s32 3, %v412
        %v414 = vrot.slane %v224, %v413
        %v415 = vlaneseq
        %v416 = vshrl.u32 %v415, 7
        %v417 = vsub.s32 4, %v416
        %v418 = vrot.slane %v224, %v417
        %v419 = vlaneseq
        %v420 = vshrl.u32 %v419, 7
        %v421 = vsub.s32 5, %v420
        %v422 = vrot.slane %v224, %v421
        %v423 = vlaneseq
        %v424 = vshrl.u32 %v423, 7
        %v425 = vsub.s32 6, %v424
        %v426 = vrot.slane %v224, %v425
        %v427 = vlaneseq
        %v428 = vshrl.u32 %v427, 7
        %v429 = vsub.s32 7, %v428
        %v430 = vrot.slane %v224, %v429
        %v431 = vlaneseq
        %v432 = vshrl.u32 %v431, 7
        %v433 = vsub.s32 0, %v432
        %v434 = vrot.slane %v227, %v433
        %v435 = vlaneseq
        %v436 = vshrl.u32 %v435, 7
        %v437 = vsub.s32 1, %v436
        %v438 = vrot.slane %v227, %v437
        %v439 = vlaneseq
        %v440 = vshrl.u32 %v439, 7
        %v441 = vsub.s32 2, %v440
        %v442 = vrot.slane %v227, %v441
        %v443 = vlaneseq
        %v444 = vshrl.u32 %v443, 7
        %v445 = vsub.s32 3, %v444
        %v446 = vrot.slane %v227, %v445
        %v447 = vlaneseq
        %v448 = vshrl.u32 %v447, 7
        %v449 = vsub.s32 4, %v448
        %v450 = vrot.slane %v227, %v449
        %v451 = vlaneseq
        %v452 = vshrl.u32 %v451, 7
        %v453 = vsub.s32 5, %v452
        %v454 = vrot.slane %v227, %v453
        %v455 = vlaneseq
        %v456 = vshrl.u32 %v455, 7
        %v457 = vsub.s32 6, %v456
        %v458 = vrot.slane %v227, %v457
        %v459 = vlaneseq
        %v460 = vshrl.u32 %v459, 7
        %v461 = vsub.s32 7, %v460
        %v462 = vrot.slane %v227, %v461
        %v463 = vlaneseq
        %v464 = vshrl.u32 %v463, 7
        %v465 = vsub.s32 0, %v464
        %v466 = vrot.slane %v230, %v465
        %v467 = vlaneseq
        %v468 = vshrl.u32 %v467, 7
        %v469 = vsub.s32 1, %v468
        %v470 = vrot.slane %v230, %v469
        %v471 = vlaneseq
        %v472 = vshrl.u32 %v471, 7
        %v473 = vsub.s32 2, %v472
        %v474 = vrot.slane %v230, %v473
        %v475 = vlaneseq
        %v476 = vshrl.u32 %v475, 7
        %v477 = vsub.s32 3, %v476
        %v478 = vrot.slane %v230, %v477
        %v479 = vlaneseq
        %v480 = vshrl.u32 %v479, 7
        %v481 = vsub.s32 4, %v480
        %v482 = vrot.slane %v230, %v481
        %v483 = vlaneseq
        %v484 = vshrl.u32 %v483, 7
        %v485 = vsub.s32 5, %v484
        %v486 = vrot.slane %v230, %v485
        %v487 = vlaneseq
        %v488 = vshrl.u32 %v487, 7
        %v489 = vsub.s32 6, %v488
        %v490 = vrot.slane %v230, %v489
        %v491 = vlaneseq
        %v492 = vshrl.u32 %v491, 7
        %v493 = vsub.s32 7, %v492
        %v494 = vrot.slane %v230, %v493
        %v495 = vcombine.low %v242, %v246
        %v496 = vcombine.low %v250, %v254
        %v497 = vcombine.low %v258, %v262
        %v498 = vcombine.low %v266, %v270
        %v500 = vunpack.c.l.s4 1966171168
        %v501 = vunpack.c.0.s8 %v500
        %v502 = vlaneseq
        %v503 = vshrl.u32 %v502, 7
        %v504 = vsub.s32 %v501, %v503
        %v505 = vrot.slane %v495, %v504
        %v507 = vunpack.c.l.s4 1966171168
        %v508 = vunpack.c.0.s8 %v507
        %v509 = vlaneseq
        %v510 = vshrl.u32 %v509, 7
        %v511 = vsub.s32 %v508, %v510
        %v512 = vrot.slane %v496, %v511
        %v514 = vunpack.c.l.s4 1966171168
        %v515 = vunpack.c.0.s8 %v514
        %v516 = vlaneseq
        %v517 = vshrl.u32 %v516, 7
        %v518 = vsub.s32 %v515, %v517
        %v519 = vrot.slane %v497, %v518
        %v521 = vunpack.c.l.s4 1966171168
        %v522 = vunpack.c.0.s8 %v521
        %v523 = vlaneseq
        %v524 = vshrl.u32 %v523, 7
        %v525 = vsub.s32 %v522, %v524
        %v526 = vrot.slane %v498, %v525
        %v527 = vcombine.low %v505, %v512
        %v528 = vcombine.low %v519, %v526
        %v530 = vunpack.c.l.s4 1966171168
        %v531 = vunpack.c.0.s8 %v530
        %v532 = vlaneseq
        %v533 = vshrl.u32 %v532, 7
        %v534 = vsub.s32 %v531, %v533
        %v535 = vrot.slane %v527, %v534
        %v537 = vunpack.c.l.s4 1966171168
        %v538 = vunpack.c.0.s8 %v537
        %v539 = vlaneseq
        %v540 = vshrl.u32 %v539, 7
        %v541 = vsub.s32 %v538, %v540
        %v542 = vrot.slane %v528, %v541
        %v543 = vcombine.low %v535, %v542
        %v544 = vcombine.low %v274, %v278
        %v545 = vcombine.low %v282, %v286
        %v546 = vcombine.low %v290, %v294
        %v547 = vcombine.low %v298, %v302
        %v549 = vunpack.c.l.s4 1966171168
        %v550 = vunpack.c.0.s8 %v549
        %v551 = vlaneseq
        %v552 = vshrl.u32 %v551, 7
        %v553 = vsub.s32 %v550, %v552
        %v554 = vrot.slane %v544, %v553
        %v556 = vunpack.c.l.s4 1966171168
        %v557 = vunpack.c.0.s8 %v556
        %v558 = vlaneseq
        %v559 = vshrl.u32 %v558, 7
        %v560 = vsub.s32 %v557, %v559
        %v561 = vrot.slane %v545, %v560
        %v563 = vunpack.c.l.s4 1966171168
        %v564 = vunpack.c.0.s8 %v563
        %v565 = vlaneseq
        %v566 = vshrl.u32 %v565, 7
        %v567 = vsub.s32 %v564, %v566
        %v568 = vrot.slane %v546, %v567
        %v570 = vunpack.c.l.s4 1966171168
        %v571 = vunpack.c.0.s8 %v570
        %v572 = vlaneseq
        %v573 = vshrl.u32 %v572, 7
        %v574 = vsub.s32 %v571, %v573
        %v575 = vrot.slane %v547, %v574
        %v576 = vcombine.low %v554, %v561
        %v577 = vcombine.low %v568, %v575
        %v579 = vunpack.c.l.s4 1966171168
        %v580 = vunpack.c.0.s8 %v579
        %v581 = vlaneseq
        %v582 = vshrl.u32 %v581, 7
        %v583 = vsub.s32 %v580, %v582
        %v584 = vrot.slane %v576, %v583
        %v586 = vunpack.c.l.s4 1966171168
        %v587 = vunpack.c.0.s8 %v586
        %v588 = vlaneseq
        %v589 = vshrl.u32 %v588, 7
        %v590 = vsub.s32 %v587, %v589
        %v591 = vrot.slane %v577, %v590
        %v592 = vcombine.low %v584, %v591
        %v593 = vcombine.low %v306, %v310
        %v594 = vcombine.low %v314, %v318
        %v595 = vcombine.low %v322, %v326
        %v596 = vcombine.low %v330, %v334
        %v598 = vunpack.c.l.s4 1966171168
        %v599 = vunpack.c.0.s8 %v598
        %v600 = vlaneseq
        %v601 = vshrl.u32 %v600, 7
        %v602 = vsub.s32 %v599, %v601
        %v603 = vrot.slane %v593, %v602
        %v605 = vunpack.c.l.s4 1966171168
        %v606 = vunpack.c.0.s8 %v605
        %v607 = vlaneseq
        %v608 = vshrl.u32 %v607, 7
        %v609 = vsub.s32 %v606, %v608
        %v610 = vrot.slane %v594, %v609
        %v612 = vunpack.c.l.s4 1966171168
        %v613 = vunpack.c.0.s8 %v612
        %v614 = vlaneseq
        %v615 = vshrl.u32 %v614, 7
        %v616 = vsub.s32 %v613, %v615
        %v617 = vrot.slane %v595, %v616
        %v619 = vunpack.c.l.s4 1966171168
        %v620 = vunpack.c.0.s8 %v619
        %v621 = vlaneseq
        %v622 = vshrl.u32 %v621, 7
        %v623 = vsub.s32 %v620, %v622
        %v624 = vrot.slane %v596, %v623
        %v625 = vcombine.low %v603, %v610
        %v626 = vcombine.low %v617, %v624
        %v628 = vunpack.c.l.s4 1966171168
        %v629 = vunpack.c.0.s8 %v628
        %v630 = vlaneseq
        %v631 = vshrl.u32 %v630, 7
        %v632 = vsub.s32 %v629, %v631
        %v633 = vrot.slane %v625, %v632
        %v635 = vunpack.c.l.s4 1966171168
        %v636 = vunpack.c.0.s8 %v635
        %v637 = vlaneseq
        %v638 = vshrl.u32 %v637, 7
        %v639 = vsub.s32 %v636, %v638
        %v640 = vrot.slane %v626, %v639
        %v641 = vcombine.low %v633, %v640
        %v642 = vcombine.low %v338, %v342
        %v643 = vcombine.low %v346, %v350
        %v644 = vcombine.low %v354, %v358
        %v645 = vcombine.low %v362, %v366
        %v647 = vunpack.c.l.s4 1966171168
        %v648 = vunpack.c.0.s8 %v647
        %v649 = vlaneseq
        %v650 = vshrl.u32 %v649, 7
        %v651 = vsub.s32 %v648, %v650
        %v652 = vrot.slane %v642, %v651
        %v654 = vunpack.c.l.s4 1966171168
        %v655 = vunpack.c.0.s8 %v654
        %v656 = vlaneseq
        %v657 = vshrl.u32 %v656, 7
        %v658 = vsub.s32 %v655, %v657
        %v659 = vrot.slane %v643, %v658
        %v661 = vunpack.c.l.s4 1966171168
        %v662 = vunpack.c.0.s8 %v661
        %v663 = vlaneseq
        %v664 = vshrl.u32 %v663, 7
        %v665 = vsub.s32 %v662, %v664
        %v666 = vrot.slane %v644, %v665
        %v668 = vunpack.c.l.s4 1966171168
        %v669 = vunpack.c.0.s8 %v668
        %v670 = vlaneseq
        %v671 = vshrl.u32 %v670, 7
        %v672 = vsub.s32 %v669, %v671
        %v673 = vrot.slane %v645, %v672
        %v674 = vcombine.low %v652, %v659
        %v675 = vcombine.low %v666, %v673
        %v677 = vunpack.c.l.s4 1966171168
        %v678 = vunpack.c.0.s8 %v677
        %v679 = vlaneseq
        %v680 = vshrl.u32 %v679, 7
        %v681 = vsub.s32 %v678, %v680
        %v682 = vrot.slane %v674, %v681
        %v684 = vunpack.c.l.s4 1966171168
        %v685 = vunpack.c.0.s8 %v684
        %v686 = vlaneseq
        %v687 = vshrl.u32 %v686, 7
        %v688 = vsub.s32 %v685, %v687
        %v689 = vrot.slane %v675, %v688
        %v690 = vcombine.low %v682, %v689
        %v691 = vcombine.low %v370, %v374
        %v692 = vcombine.low %v378, %v382
        %v693 = vcombine.low %v386, %v390
        %v694 = vcombine.low %v394, %v398
        %v696 = vunpack.c.l.s4 1966171168
        %v697 = vunpack.c.0.s8 %v696
        %v698 = vlaneseq
        %v699 = vshrl.u32 %v698, 7
        %v700 = vsub.s32 %v697, %v699
        %v701 = vrot.slane %v691, %v700
        %v703 = vunpack.c.l.s4 1966171168
        %v704 = vunpack.c.0.s8 %v703
        %v705 = vlaneseq
        %v706 = vshrl.u32 %v705, 7
        %v707 = vsub.s32 %v704, %v706
        %v708 = vrot.slane %v692, %v707
        %v710 = vunpack.c.l.s4 1966171168
        %v711 = vunpack.c.0.s8 %v710
        %v712 = vlaneseq
        %v713 = vshrl.u32 %v712, 7
        %v714 = vsub.s32 %v711, %v713
        %v715 = vrot.slane %v693, %v714
        %v717 = vunpack.c.l.s4 1966171168
        %v718 = vunpack.c.0.s8 %v717
        %v719 = vlaneseq
        %v720 = vshrl.u32 %v719, 7
        %v721 = vsub.s32 %v718, %v720
        %v722 = vrot.slane %v694, %v721
        %v723 = vcombine.low %v701, %v708
        %v724 = vcombine.low %v715, %v722
        %v726 = vunpack.c.l.s4 1966171168
        %v727 = vunpack.c.0.s8 %v726
        %v728 = vlaneseq
        %v729 = vshrl.u32 %v728, 7
        %v730 = vsub.s32 %v727, %v729
        %v731 = vrot.slane %v723, %v730
        %v733 = vunpack.c.l.s4 1966171168
        %v734 = vunpack.c.0.s8 %v733
        %v735 = vlaneseq
        %v736 = vshrl.u32 %v735, 7
        %v737 = vsub.s32 %v734, %v736
        %v738 = vrot.slane %v724, %v737
        %v739 = vcombine.low %v731, %v738
        %v740 = vcombine.low %v402, %v406
        %v741 = vcombine.low %v410, %v414
        %v742 = vcombine.low %v418, %v422
        %v743 = vcombine.low %v426, %v430
        %v745 = vunpack.c.l.s4 1966171168
        %v746 = vunpack.c.0.s8 %v745
        %v747 = vlaneseq
        %v748 = vshrl.u32 %v747, 7
        %v749 = vsub.s32 %v746, %v748
        %v750 = vrot.slane %v740, %v749
        %v752 = vunpack.c.l.s4 1966171168
        %v753 = vunpack.c.0.s8 %v752
        %v754 = vlaneseq
        %v755 = vshrl.u32 %v754, 7
        %v756 = vsub.s32 %v753, %v755
        %v757 = vrot.slane %v741, %v756
        %v759 = vunpack.c.l.s4 1966171168
        %v760 = vunpack.c.0.s8 %v759
        %v761 = vlaneseq
        %v762 = vshrl.u32 %v761, 7
        %v763 = vsub.s32 %v760, %v762
        %v764 = vrot.slane %v742, %v763
        %v766 = vunpack.c.l.s4 1966171168
        %v767 = vunpack.c.0.s8 %v766
        %v768 = vlaneseq
        %v769 = vshrl.u32 %v768, 7
        %v770 = vsub.s32 %v767, %v769
        %v771 = vrot.slane %v743, %v770
        %v772 = vcombine.low %v750, %v757
        %v773 = vcombine.low %v764, %v771
        %v775 = vunpack.c.l.s4 1966171168
        %v776 = vunpack.c.0.s8 %v775
        %v777 = vlaneseq
        %v778 = vshrl.u32 %v777, 7
        %v779 = vsub.s32 %v776, %v778
        %v780 = vrot.slane %v772, %v779
        %v782 = vunpack.c.l.s4 1966171168
        %v783 = vunpack.c.0.s8 %v782
        %v784 = vlaneseq
        %v785 = vshrl.u32 %v784, 7
        %v786 = vsub.s32 %v783, %v785
        %v787 = vrot.slane %v773, %v786
        %v788 = vcombine.low %v780, %v787
        %v789 = vcombine.low %v434, %v438
        %v790 = vcombine.low %v442, %v446
        %v791 = vcombine.low %v450, %v454
        %v792 = vcombine.low %v458, %v462
        %v794 = vunpack.c.l.s4 1966171168
        %v795 = vunpack.c.0.s8 %v794
        %v796 = vlaneseq
        %v797 = vshrl.u32 %v796, 7
        %v798 = vsub.s32 %v795, %v797
        %v799 = vrot.slane %v789, %v798
        %v801 = vunpack.c.l.s4 1966171168
        %v802 = vunpack.c.0.s8 %v801
        %v803 = vlaneseq
        %v804 = vshrl.u32 %v803, 7
        %v805 = vsub.s32 %v802, %v804
        %v806 = vrot.slane %v790, %v805
        %v808 = vunpack.c.l.s4 1966171168
        %v809 = vunpack.c.0.s8 %v808
        %v810 = vlaneseq
        %v811 = vshrl.u32 %v810, 7
        %v812 = vsub.s32 %v809, %v811
        %v813 = vrot.slane %v791, %v812
        %v815 = vunpack.c.l.s4 1966171168
        %v816 = vunpack.c.0.s8 %v815
        %v817 = vlaneseq
        %v818 = vshrl.u32 %v817, 7
        %v819 = vsub.s32 %v816, %v818
        %v820 = vrot.slane %v792, %v819
        %v821 = vcombine.low %v799, %v806
        %v822 = vcombine.low %v813, %v820
        %v824 = vunpack.c.l.s4 1966171168
        %v825 = vunpack.c.0.s8 %v824
        %v826 = vlaneseq
        %v827 = vshrl.u32 %v826, 7
        %v828 = vsub.s32 %v825, %v827
        %v829 = vrot.slane %v821, %v828
        %v831 = vunpack.c.l.s4 1966171168
        %v832 = vunpack.c.0.s8 %v831
        %v833 = vlaneseq
        %v834 = vshrl.u32 %v833, 7
        %v835 = vsub.s32 %v832, %v834
        %v836 = vrot.slane %v822, %v835
        %v837 = vcombine.low %v829, %v836
        %v838 = vcombine.low %v466, %v470
        %v839 = vcombine.low %v474, %v478
        %v840 = vcombine.low %v482, %v486
        %v841 = vcombine.low %v490, %v494
        %v843 = vunpack.c.l.s4 1966171168
        %v844 = vunpack.c.0.s8 %v843
        %v845 = vlaneseq
        %v846 = vshrl.u32 %v845, 7
        %v847 = vsub.s32 %v844, %v846
        %v848 = vrot.slane %v838, %v847
        %v850 = vunpack.c.l.s4 1966171168
        %v851 = vunpack.c.0.s8 %v850
        %v852 = vlaneseq
        %v853 = vshrl.u32 %v852, 7
        %v854 = vsub.s32 %v851, %v853
        %v855 = vrot.slane %v839, %v854
        %v857 = vunpack.c.l.s4 1966171168
        %v858 = vunpack.c.0.s8 %v857
        %v859 = vlaneseq
        %v860 = vshrl.u32 %v859, 7
        %v861 = vsub.s32 %v858, %v860
        %v862 = vrot.slane %v840, %v861
        %v864 = vunpack.c.l.s4 1966171168
        %v865 = vunpack.c.0.s8 %v864
        %v866 = vlaneseq
        %v867 = vshrl.u32 %v866, 7
        %v868 = vsub.s32 %v865, %v867
        %v869 = vrot.slane %v841, %v868
        %v870 = vcombine.low %v848, %v855
        %v871 = vcombine.low %v862, %v869
        %v873 = vunpack.c.l.s4 1966171168
        %v874 = vunpack.c.0.s8 %v873
        %v875 = vlaneseq
        %v876 = vshrl.u32 %v875, 7
        %v877 = vsub.s32 %v874, %v876
        %v878 = vrot.slane %v870, %v877
        %v880 = vunpack.c.l.s4 1966171168
        %v881 = vunpack.c.0.s8 %v880
        %v882 = vlaneseq
        %v883 = vshrl.u32 %v882, 7
        %v884 = vsub.s32 %v881, %v883
        %v885 = vrot.slane %v871, %v884
        %v886 = vcombine.low %v878, %v885
        %887 = vset.pattern.permute.xlu0 0
        %888 = vperm.xlu0 %887, %v543
        %v889 = vpop.permute.xlu0 %888
        %890 = vset.pattern.permute.xlu0 0
        %891 = vperm.xlu0 %890, %v592
        %v892 = vpop.permute.xlu0 %891
        %893 = vset.pattern.permute.xlu0 0
        %894 = vperm.xlu0 %893, %v641
        %v895 = vpop.permute.xlu0 %894
        %896 = vset.pattern.permute.xlu0 0
        %897 = vperm.xlu0 %896, %v690
        %v898 = vpop.permute.xlu0 %897
        %899 = vset.pattern.permute.xlu0 0
        %900 = vperm.xlu0 %899, %v739
        %v901 = vpop.permute.xlu0 %900
        %902 = vset.pattern.permute.xlu0 0
        %903 = vperm.xlu0 %902, %v788
        %v904 = vpop.permute.xlu0 %903
        %905 = vset.pattern.permute.xlu0 0
        %906 = vperm.xlu0 %905, %v837
        %v907 = vpop.permute.xlu0 %906
        %908 = vset.pattern.permute.xlu0 0
        %909 = vperm.xlu0 %908, %v886
        %v910 = vpop.permute.xlu0 %909
        %v911 = vlaneseq
        %v912 = vand.u32 %v911, 127
        %v913 = vlaneseq
        %v914 = vshrl.u32 %v913, 7
        %v915 = vsub.s32 %v912, %v914
        %v916 = vrot.slane %v889, %v915
        %v917 = vadd.s32 %v912, 4294967288
        %v918 = vlaneseq
        %v919 = vshrl.u32 %v918, 7
        %v920 = vsub.s32 %v917, %v919
        %v921 = vrot.slane %v892, %v920
        %vm922 = vcmask 130112
        %v923 = vsel %vm922, %v921, %v916
        %v924 = vadd.s32 %v912, 4294967280
        %v925 = vlaneseq
        %v926 = vshrl.u32 %v925, 7
        %v927 = vsub.s32 %v924, %v926
        %v928 = vrot.slane %v895, %v927
        %vm929 = vcmask 195712
        %v930 = vsel %vm929, %v928, %v923
        %v931 = vadd.s32 %v912, 4294967272
        %v932 = vlaneseq
        %v933 = vshrl.u32 %v932, 7
        %v934 = vsub.s32 %v931, %v933
        %v935 = vrot.slane %v898, %v934
        %vm936 = vcmask 261312
        %v937 = vsel %vm936, %v935, %v930
        %v938 = vadd.s32 %v912, 4294967264
        %v939 = vlaneseq
        %v940 = vshrl.u32 %v939, 7
        %v941 = vsub.s32 %v938, %v940
        %v942 = vrot.slane %v901, %v941
        %vm943 = vcmask 326912
        %v944 = vsel %vm943, %v942, %v937
        %v945 = vadd.s32 %v912, 4294967256
        %v946 = vlaneseq
        %v947 = vshrl.u32 %v946, 7
        %v948 = vsub.s32 %v945, %v947
        %v949 = vrot.slane %v904, %v948
        %vm950 = vcmask 392512
        %v951 = vsel %vm950, %v949, %v944
        %v952 = vadd.s32 %v912, 4294967248
        %v953 = vlaneseq
        %v954 = vshrl.u32 %v953, 7
        %v955 = vsub.s32 %v952, %v954
        %v956 = vrot.slane %v907, %v955
        %vm957 = vcmask 458112
        %v958 = vsel %vm957, %v956, %v951
        %v959 = vadd.s32 %v912, 4294967240
        %v960 = vlaneseq
        %v961 = vshrl.u32 %v960, 7
        %v962 = vsub.s32 %v959, %v961
        %v963 = vrot.slane %v910, %v962
        %vm964 = vcmask 523712
        %v965 = vsel %vm964, %v963, %v958
        %v967 = vunpack.c.l.s4 1966171168
        %v968 = vunpack.c.0.s8 %v967
        %v969 = vlaneseq
        %v970 = vshrl.u32 %v969, 7
        %v971 = vsub.s32 %v968, %v970
        %v972 = vrot.slane %v965, %v971
        %v974 = vunpack.c.l.s4 1966171168
        %v975 = vunpack.c.0.s8 %v974
        %v976 = vlaneseq
        %v977 = vshrl.u32 %v976, 7
        %v978 = vsub.s32 %v975, %v977
        %v979 = vrot.slane %v972, %v978
        %v981 = vadd.f32 %v205, %v979
        %vm982 = vcmask 516096
        %983 = vst.msk [vmem:[#allocation2] sm:$0x1] %vm982, %v981
        // Predicated region
        $region37: #{se_layer.1} parent=31 // pred_check
          %p984 = pneg %p191
        $region38: #{se_layer.1} parent=31 // pred_check_branch
          %986 = sbr.rel (%p984) target = $region40
        $region39: #{se_layer.1} parent=31 // pred_region
          %v987 = vld [vmem:[#allocation2] sm:$0x1]
          %v988 = vmul.f32 %v987, 0.015625
          %v989 = vld [vmem:[%s1] sm:$0xff]
          %v990 = vld [vmem:[%s1 + $0x8] sm:$0xff]
          %v991 = vld [vmem:[%s1 + $0x10] sm:$0xff]
          %v992 = vld [vmem:[%s1 + $0x18] sm:$0xff]
          %v993 = vld [vmem:[%s1 + $0x20] sm:$0xff]
          %v994 = vld [vmem:[%s1 + $0x28] sm:$0xff]
          %v995 = vld [vmem:[%s1 + $0x30] sm:$0xff]
          %v996 = vld [vmem:[%s1 + $0x38] sm:$0xff]
          %v998 = vsel %vm206, %v988, 0
          %1000 = vmatprep.subr.mxu0 0.0
          %1001 = vmatpush1.msra.mxu0 0.0
          %1002 = vmatprep.subr.mxu0 0.0
          %1003 = vmatpush1.msra.mxu0 0.0
          %1004 = vmatprep.subr.mxu0 0.0
          %1005 = vmatpush1.msra.mxu0 0.0
          %1006 = vmatprep.subr.mxu0 0.0
          %1007 = vmatpush1.msra.mxu0 0.0
          %1008 = vmatprep.subr.mxu0 0.0
          %1009 = vmatpush1.msra.mxu0 0.0
          %1010 = vmatprep.subr.mxu0 0.0
          %1011 = vmatpush1.msra.mxu0 0.0
          %1012 = vmatprep.subr.mxu0 0.0
          %1013 = vmatpush1.msra.mxu0 0.0
          %1014 = vmatprep.subr.mxu0 0.0
          %1015 = vmatpush1.msra.mxu0 0.0
          %1016 = vmatprep.subr.mxu0 0.0
          %1017 = vmatpush1.msra.mxu0 %v996
          %1018 = vmatprep.subr.mxu0 0.0
          %1019 = vmatpush1.msra.mxu0 %v995
          %1020 = vmatprep.subr.mxu0 0.0
          %1021 = vmatpush1.msra.mxu0 %v994
          %1022 = vmatprep.subr.mxu0 0.0
          %1023 = vmatpush1.msra.mxu0 %v993
          %1024 = vmatprep.subr.mxu0 0.0
          %1025 = vmatpush1.msra.mxu0 %v992
          %1026 = vmatprep.subr.mxu0 0.0
          %1027 = vmatpush1.msra.mxu0 %v991
          %1028 = vmatprep.subr.mxu0 0.0
          %1029 = vmatpush1.msra.mxu0 %v990
          %1030 = vmatprep.subr.mxu0 0.0
          %1031 = vmatpush1.msra.mxu0 %v989
          %1032 = vmatprep.subr.mxu0 0.0
          %1033 = vmatpush2.msra.mxu0 0.0
          %1034 = vmatprep.subr.mxu0 0.0
          %1035 = vmatpush2.msra.mxu0 0.0
          %1036 = vmatprep.subr.mxu0 0.0
          %1037 = vmatpush2.msra.mxu0 0.0
          %1038 = vmatprep.subr.mxu0 0.0
          %1039 = vmatpush2.msra.mxu0 0.0
          %1040 = vmatprep.subr.mxu0 0.0
          %1041 = vmatpush2.msra.mxu0 0.0
          %1042 = vmatprep.subr.mxu0 0.0
          %1043 = vmatpush2.msra.mxu0 0.0
          %1044 = vmatprep.subr.mxu0 0.0
          %1045 = vmatpush2.msra.mxu0 0.0
          %1046 = vmatprep.subr.mxu0 0.0
          %1047 = vmatpush2.msra.mxu0 0.0
          %1048 = vmatprep.subr.mxu0 0.0
          %1049 = vmatpush2.msra.mxu0 0.0
          %1050 = vmatprep.subr.mxu0 0.0
          %1051 = vmatpush2.msra.mxu0 0.0
          %1052 = vmatprep.subr.mxu0 0.0
          %1053 = vmatpush2.msra.mxu0 0.0
          %1054 = vmatprep.subr.mxu0 0.0
          %1055 = vmatpush2.msra.mxu0 0.0
          %1056 = vmatprep.subr.mxu0 0.0
          %1057 = vmatpush2.msra.mxu0 0.0
          %1058 = vmatprep.subr.mxu0 0.0
          %1059 = vmatpush2.msra.mxu0 0.0
          %1060 = vmatprep.subr.mxu0 0.0
          %1061 = vmatpush2.msra.mxu0 0.0
          %1062 = vmatprep.subr.mxu0 0.0
          %1063 = vmatpush2.msra.mxu0 0.0
          %1064 = vmatprep.mubr.f32.mxu0 0.0
          %1065 = vmatmul.mubr.f32.gmra.mxu0 %v998
          %v1066 = vpop.f32.mrf.mxu0
          %v1067 = vadd.f32 0.0, %v1066
          %v1068 = vpop.f32.mrf.mxu0
          %1069 = vdwg.mxu0
          %v1070 = vmax.f32 %v1067, 0.0
          %v1071 = vld [vmem:[%s2] sm:$0xf]
          %vm1072 = vcmask 31744
          %v1074 = vsel %vm1072, %v1070, 0
          %vm1076 = vcmask 1043456
          %v1078 = vsel %vm1076, %v1071, 0
          %1080 = vmatprep.subr.mxu0 0.0
          %1081 = vmatpush1.msra.mxu0 0.0
          %1082 = vmatprep.subr.mxu0 0.0
          %1083 = vmatpush1.msra.mxu0 0.0
          %1084 = vmatprep.subr.mxu0 0.0
          %1085 = vmatpush1.msra.mxu0 0.0
          %1086 = vmatprep.subr.mxu0 0.0
          %1087 = vmatpush1.msra.mxu0 0.0
          %1088 = vmatprep.subr.mxu0 0.0
          %1089 = vmatpush1.msra.mxu0 0.0
          %1090 = vmatprep.subr.mxu0 0.0
          %1091 = vmatpush1.msra.mxu0 0.0
          %1092 = vmatprep.subr.mxu0 0.0
          %1093 = vmatpush1.msra.mxu0 0.0
          %1094 = vmatprep.subr.mxu0 0.0
          %1095 = vmatpush1.msra.mxu0 0.0
          %1096 = vmatprep.subr.mxu0 0.0
          %1097 = vmatpush1.msra.mxu0 0.0
          %1098 = vmatprep.subr.mxu0 0.0
          %1099 = vmatpush1.msra.mxu0 0.0
          %1100 = vmatprep.subr.mxu0 0.0
          %1101 = vmatpush1.msra.mxu0 0.0
          %1102 = vmatprep.subr.mxu0 0.0
          %1103 = vmatpush1.msra.mxu0 0.0
          %1104 = vmatprep.subr.mxu0 0.0
          %1105 = vmatpush1.msra.mxu0 0.0
          %1106 = vmatprep.subr.mxu0 0.0
          %1107 = vmatpush1.msra.mxu0 0.0
          %1108 = vmatprep.subr.mxu0 0.0
          %1109 = vmatpush1.msra.mxu0 0.0
          %1110 = vmatprep.subr.mxu0 0.0
          %1111 = vmatpush1.msra.mxu0 %v1078
          %1112 = vmatprep.subr.mxu0 0.0
          %1113 = vmatpush2.msra.mxu0 0.0
          %1114 = vmatprep.subr.mxu0 0.0
          %1115 = vmatpush2.msra.mxu0 0.0
          %1116 = vmatprep.subr.mxu0 0.0
          %1117 = vmatpush2.msra.mxu0 0.0
          %1118 = vmatprep.subr.mxu0 0.0
          %1119 = vmatpush2.msra.mxu0 0.0
          %1120 = vmatprep.subr.mxu0 0.0
          %1121 = vmatpush2.msra.mxu0 0.0
          %1122 = vmatprep.subr.mxu0 0.0
          %1123 = vmatpush2.msra.mxu0 0.0
          %1124 = vmatprep.subr.mxu0 0.0
          %1125 = vmatpush2.msra.mxu0 0.0
          %1126 = vmatprep.subr.mxu0 0.0
          %1127 = vmatpush2.msra.mxu0 0.0
          %1128 = vmatprep.subr.mxu0 0.0
          %1129 = vmatpush2.msra.mxu0 0.0
          %1130 = vmatprep.subr.mxu0 0.0
          %1131 = vmatpush2.msra.mxu0 0.0
          %1132 = vmatprep.subr.mxu0 0.0
          %1133 = vmatpush2.msra.mxu0 0.0
          %1134 = vmatprep.subr.mxu0 0.0
          %1135 = vmatpush2.msra.mxu0 0.0
          %1136 = vmatprep.subr.mxu0 0.0
          %1137 = vmatpush2.msra.mxu0 0.0
          %1138 = vmatprep.subr.mxu0 0.0
          %1139 = vmatpush2.msra.mxu0 0.0
          %1140 = vmatprep.subr.mxu0 0.0
          %1141 = vmatpush2.msra.mxu0 0.0
          %1142 = vmatprep.subr.mxu0 0.0
          %1143 = vmatpush2.msra.mxu0 0.0
          %1144 = vmatprep.mubr.f32.mxu0 0.0
          %1145 = vmatmul.mubr.f32.gmra.mxu0 %v1074
          %v1146 = vpop.f32.mrf.mxu0
          %v1147 = vadd.f32 0.0, %v1146
          %v1148 = vpop.f32.mrf.mxu0
          %1149 = vdwg.mxu0
          %v1150 = vxor.u32 %v1147, 2147483648
          %v1151 = vmul.f32 %v1150, 1.442695
          %v1152 = vpow.pop %v1151
          %v1153 = vadd.f32 %v1152, 1.0
          %v1154 = vrcp.pop %v1153
          %v1155 = vmul.f32 1.0, %v1154
          %1156 = vst.msk [vmem:[%s182] sm:$0x1] %vm982, %v1155
        $region40: #{se_layer.1} parent=31 // pred_fallthru
          _
        %s1157 = sand.u32 %s107, 1
        %s1158 = scalar_lea.sflag [#allocation4], %s1157
        %s1159 = sand.u32 %s107, 1
        %s1160 = scalar_lea.vmem [#allocation3], %s1159
        // Predicated region
        $region41: #{se_layer.1} parent=31 // pred_check
          %p1161 = pneg %p117
        $region42: #{se_layer.1} parent=31 // pred_check_branch
          %1163 = sbr.rel (%p1161) target = $region44
        $region43: #{se_layer.1} parent=31 // pred_region
          %s1165 = ssub.s32 16, 16
          %1166 = vsyncadd %s1158, %s1165
          %s1167 = smul.addr %s21, 16
          %s1168 = scalar_lea.hbm %s3, %s1167
          %s1170 = sshll.u32 %s1160, 4
          %s1171 = int_to_ptr.vmem [resolvable:$true] %s1170
          %1173 = dma.vmem_to_hbm [thread:$0]  %s1171, 16, %s1168, %s1158
        $region44: #{se_layer.1} parent=31 // pred_fallthru
          _
      $region32: #{se_layer.1} parent=5 // pred_fallthru
        _
      %p1174 = scmp.le.s32.totalorder 2, %s12
      // Predicated region
      $region45: #{se_layer.1} parent=5 // pred_check
        %p1175 = pneg %p1174
      $region46: #{se_layer.1} parent=5 // pred_check_branch
        %1177 = sbr.rel (%p1175) target = $region48
      $region47: #{se_layer.1} parent=5 // pred_region
        %s1178 = ssub.s32 %s12, 2
        // Predicated region
        $region49: #{se_layer.1} parent=47 // pred_check
          %p1179 = pneg %p123
        $region50: #{se_layer.1} parent=47 // pred_check_branch
          %1181 = sbr.rel (%p1179) target = $region52
        $region51: #{se_layer.1} parent=47 // pred_region
          %s1182 = sand.u32 %s108, 1
          %s1183 = scalar_lea.sflag [#allocation4], %s1182
          %s1184 = sand.u32 %s108, 1
          %s1185 = scalar_lea.vmem [#allocation3], %s1184
          %1186 = dma.done %s1183, 16
        $region52: #{se_layer.1} parent=47 // pred_fallthru
          _
      $region48: #{se_layer.1} parent=5 // pred_fallthru
        _
    $region6: #{se_layer.1} parent=1 // loop_footer
      %s16 = sadd.s32 1, %s12
    $region7: #{se_layer.1} parent=1 // loop_footer_branch
      %11 = sbr.rel target = $region3
    $region8: #{se_layer.1} parent=1 // loop_exit
      _
    %1187 = vsyncpa [#allocation4], 1
    %s1188 = scalar_lea.sflag [#allocation4], 1
    %1189 = vsyncpa %s1188, 1

</llo_original>
